<compile_context>
chip_gen: v6e
topology: v6e:2x2x1
jax: 0.10.0
libtpu: 0.0.40
codegen_flags: <defaults>
</compile_context>

<pallas_src>
import functools

import jax
import jax.numpy as jnp
from jax.experimental import pallas as pl
from jax.experimental.pallas import tpu as pltpu

BN_EPS = 1e-5


def _round_up(x, m):
    return (x + m - 1) // m * m


def _chip_config():
    """Best-effort hardware query with safe fallbacks (works off-TPU too)."""
    tn, tk = 128, 256            # v5e-friendly defaults (4x 128x128 MXU)
    vmem_cap = 64 << 20          # most conservative per-core VMEM (v7x)
    try:
        info = pltpu.get_tpu_info()
        cap = int(getattr(info, "vmem_capacity_bytes", 0) or 0)
        if cap > 0:
            vmem_cap = cap
        ver = str(getattr(info, "chip_version", ""))
        if any(t in ver for t in ("6", "7")):   # v6e / v7x: 2x 256x256 MXU
            tn, tk = 256, 256
    except Exception:
        pass
    return tn, tk, vmem_cap


def _vmem_limit(vmem_needed, vmem_cap):
    # Default scoped VMEM limit is 16 MiB on v5e, 32 MiB on v6e/v7x.  Trigger
    # on the most conservative default; cap below physical VMEM with headroom
    # for compiler scratch.
    default_scoped = 16 << 20
    if vmem_needed <= default_scoped:
        return None
    cap_limit = max(vmem_cap - (12 << 20), 32 << 20)
    return int(min(max(int(vmem_needed * 1.25), 16 << 20), cap_limit))


def _elasticnet_kernel(x_ref, wt_ref, bgb_ref, o_ref, *scratch, batch,
                       padded_batch, x_resident, tk, acc_is_out):
    """Grid = (n over D_out tiles, k over D_in tiles); k is the reduction axis."""
    acc_ref = o_ref if acc_is_out else scratch[0]
    k = pl.program_id(1)

    @pl.when(k == 0)
    def _init():
        acc_ref[...] = jnp.zeros_like(acc_ref)

    if x_resident:
        # x is fully resident in VMEM; slice the current K chunk in place.
        start = pl.multiple_of(k * tk, tk)
        x_blk = x_ref[:, pl.ds(start, tk)]
    else:
        x_blk = x_ref[...]

    # MXU matmul: x (B, tk) @ W^T (tk, tn); W arrives pre-transposed -> no
    # in-kernel XLU transpose.  Always accumulate in f32.
    acc_ref[...] += jnp.dot(x_blk, wt_ref[...],
                            preferred_element_type=jnp.float32)

    @pl.when(k == pl.num_programs(1) - 1)
    def _epilogue():
        bias = bgb_ref[0:1, :]
        gamma = bgb_ref[1:2, :]
        beta = bgb_ref[2:3, :]

        z = acc_ref[...] + bias                      # (B_pad, tn) f32
        inv_b = 1.0 / batch
        if batch == padded_batch:
            mean = jnp.sum(z, axis=0, keepdims=True) * inv_b
            centered = z - mean
            var = jnp.sum(centered * centered, axis=0, keepdims=True) * inv_b
        else:
            # Padded batch rows must not contaminate the batch statistics.
            row = jax.lax.broadcasted_iota(jnp.int32, (padded_batch, 1), 0)
            valid = row < batch
            zv = jnp.where(valid, z, 0.0)
            mean = jnp.sum(zv, axis=0, keepdims=True) * inv_b
            centered = z - mean
            cv = jnp.where(valid, centered, 0.0)
            var = jnp.sum(cv * cv, axis=0, keepdims=True) * inv_b

        # Fold gamma into the inv-std scale: one (1, tn) multiply.
        scale = gamma * jax.lax.rsqrt(var + BN_EPS)
        o_ref[...] = (centered * scale + beta).astype(o_ref.dtype)


@functools.partial(jax.jit,
                   static_argnames=("compute_dtype", "tn", "tk", "vmem_cap"))
def _elasticnet_forward(x, weight, bias, gamma, beta, *, compute_dtype, tn, tk,
                        vmem_cap):
    B, D_in = x.shape
    D_out = weight.shape[0]
    out_dtype = x.dtype
    c_bytes = jnp.dtype(compute_dtype).itemsize
    out_bytes = jnp.dtype(out_dtype).itemsize

    # Pad feature dims to the 128-lane minimum (not the tile size) and clamp
    # tiles to the padded dims; batch to the sublane packing of the operand
    # dtype (8 for f32, 16 for bf16).
    sub = 16 if c_bytes == 2 else 8
    B_pad = _round_up(B, sub)
    Din_pad = _round_up(D_in, 128)
    Dout_pad = _round_up(D_out, 128)

    tk = min(tk, Din_pad)
    if Din_pad % tk:
        tk = 128                      # Din_pad is a multiple of 128
    tn = min(tn, Dout_pad)
    if Dout_pad % tn:
        tn = 128
    # Megacore guard (v7x): keep >= 2 feature tiles whenever D_out allows it.
    while Dout_pad // tn < 2 and tn > 128:
        tn //= 2

    n_tiles = Dout_pad // tn
    k_tiles = Din_pad // tk

    # Cast to the compute dtype *before* padding/transposing (avoids extra f32
    # HBM copies per call).  NOTE: for fixed inference weights, hoist the
    # weight transpose+pad+cast out of the per-forward path.
    x_p = jnp.pad(x.astype(compute_dtype),
                  ((0, B_pad - B), (0, Din_pad - D_in)))
    wt_p = jnp.pad(weight.astype(compute_dtype).T,
                   ((0, Din_pad - D_in), (0, Dout_pad - D_out)))
    pad_o = (0, Dout_pad - D_out)
    bgb = jnp.stack([
        jnp.pad(bias.astype(jnp.float32), pad_o),
        jnp.pad(gamma.astype(jnp.float32), pad_o, constant_values=1.0),
        jnp.pad(beta.astype(jnp.float32), pad_o),
    ])                                                     # (3, Dout_pad) f32

    # f32 output -> accumulate directly into the resident output block.
    acc_is_out = jnp.dtype(out_dtype) == jnp.dtype(jnp.float32)

    # Keep x fully resident (one DMA total) when it fits a small budget;
    # otherwise stream K tiles (accepting the per-n-tile replication).
    x_bytes = B_pad * Din_pad * c_bytes
    x_resident = x_bytes <= (8 << 20)

    # Deeper W^T pipelining for small-batch, many-K (HBM-bound on W streaming).
    deep_w = (B_pad <= 128) and (k_tiles >= 3)
    wt_spec = pl.BlockSpec((tk, tn), lambda n, k: (k, n))
    if deep_w:
        try:
            wt_spec = pl.BlockSpec((tk, tn), lambda n, k: (k, n),
                                   pipeline_mode=pl.Buffered(3))
        except TypeError:
            deep_w = False

    if x_resident:
        x_spec = pl.BlockSpec((B_pad, Din_pad), lambda n, k: (0, 0))
        x_vmem = 2 * x_bytes
    else:
        x_spec = pl.BlockSpec((B_pad, tk), lambda n, k: (0, k))
        x_vmem = 2 * B_pad * tk * c_bytes

    wt_bufs = 3 if deep_w else 2
    vmem_needed = (x_vmem
                   + wt_bufs * tk * tn * c_bytes           # W^T tiles
                   + 2 * 8 * tn * 4                        # fused bias/gamma/beta
                   + 2 * B_pad * tn * out_bytes            # output blocks
                   + (0 if acc_is_out else B_pad * tn * 4))  # f32 accumulator
    # TODO(synk): add a batch-streamed two-pass BN path (per-feature sum/sumsq
    # partials + second normalize pass) for training-sized batches that exceed
    # the batch-resident VMEM budget on v7x (64 MiB per TensorCore).

    kernel = functools.partial(
        _elasticnet_kernel, batch=B, padded_batch=B_pad,
        x_resident=x_resident, tk=tk, acc_is_out=acc_is_out)
    scratch = [] if acc_is_out else [pltpu.VMEM((B_pad, tn), jnp.float32)]

    out_padded = pl.pallas_call(
        kernel,
        out_shape=jax.ShapeDtypeStruct((B_pad, Dout_pad), out_dtype),
        grid=(n_tiles, k_tiles),
        in_specs=[
            x_spec,                                        # activations
            wt_spec,                                       # W^T tile
            pl.BlockSpec((3, tn), lambda n, k: (0, n)),    # bias/gamma/beta
        ],
        out_specs=pl.BlockSpec((B_pad, tn), lambda n, k: (0, n)),
        scratch_shapes=scratch,
        compiler_params=pltpu.CompilerParams(
            dimension_semantics=("parallel", "arbitrary"),
            vmem_limit_bytes=_vmem_limit(vmem_needed, vmem_cap),
        ),
    )(x_p, wt_p, bgb)

    return out_padded[:B, :D_out]


def elasticnet_forward(x, weight, bias, gamma, beta, *,
                       compute_dtype=jnp.float32, tn=None, tk=None):
    """x: (B, D_in); weight: (D_out, D_in) torch-style; bias/gamma/beta: (D_out,)."""
    d_tn, d_tk, vmem_cap = _chip_config()
    tn = d_tn if tn is None else tn
    tk = d_tk if tk is None else tk
    return _elasticnet_forward(x, weight, bias, gamma, beta,
                               compute_dtype=compute_dtype, tn=tn, tk=tk,
                               vmem_cap=vmem_cap)


def reference_forward(x, weight, bias, gamma, beta, compute_dtype=jnp.float32):
    z = jnp.dot(x.astype(compute_dtype), weight.astype(compute_dtype).T,
                preferred_element_type=jnp.float32) + bias
    mean = jnp.mean(z, axis=0, keepdims=True)
    var = jnp.mean((z - mean) ** 2, axis=0, keepdims=True)
    out = gamma * (z - mean) / jnp.sqrt(var + BN_EPS) + beta
    return out.astype(x.dtype)


if __name__ == "__main__":
    key = jax.random.PRNGKey(0)

    # --- Small demo shapes matching the module (ElasticNet head) -----------
    B, D_in, D_out = 8, 32, 16
    k_x, k_w, k_b = jax.random.split(key, 3)
    x = jax.random.normal(k_x, (B, D_in), dtype=jnp.float32)
    # nn.Linear init: U(-k, k), k = 1/sqrt(D_in); fresh BatchNorm1d: gamma=1, beta=0.
    bound = 1.0 / (D_in ** 0.5)
    weight = jax.random.uniform(k_w, (D_out, D_in), jnp.float32, -bound, bound)
    bias = jax.random.uniform(k_b, (D_out,), jnp.float32, -bound, bound)
    gamma = jnp.ones((D_out,), jnp.float32)
    beta = jnp.zeros((D_out,), jnp.float32)

    # 1) f32 strict-accuracy path (output accumulates in-place in o_ref).
    out = jax.block_until_ready(elasticnet_forward(x, weight, bias, gamma, beta))
    ref = reference_forward(x, weight, bias, gamma, beta)
    assert out.shape == (B, D_out)
    assert jnp.allclose(out, ref, atol=1e-4, rtol=1e-4), "f32 mismatch"

    # 2) bf16 MXU operands, f32 accumulation/BN/output (exercises masked batch
    #    statistics since B_pad=16 > B=8).
    out_bf = jax.block_until_ready(
        elasticnet_forward(x, weight, bias, gamma, beta,
                           compute_dtype=jnp.bfloat16))
    ref_bf = reference_forward(x, weight, bias, gamma, beta,
                               compute_dtype=jnp.bfloat16)
    assert jnp.allclose(out_bf, ref_bf, atol=1e-2, rtol=1e-2), "bf16-op mismatch"

    # 3) bf16 activations end-to-end (bf16 output) -> exercises the scratch
    #    accumulator path and the epilogue downcast.
    x_b16 = x.astype(jnp.bfloat16)
    out3 = jax.block_until_ready(
        elasticnet_forward(x_b16, weight, bias, gamma, beta,
                           compute_dtype=jnp.bfloat16))
    ref3 = reference_forward(x_b16, weight, bias, gamma, beta,
                             compute_dtype=jnp.bfloat16)
    assert out3.dtype == jnp.bfloat16
    assert jnp.allclose(out3.astype(jnp.float32), ref3.astype(jnp.float32),
                        atol=5e-2, rtol=5e-2), "bf16 end-to-end mismatch"

    # 4) Multi-tile f32 case: resident x sliced across K tiles, several N tiles.
    B2, Din2, Dout2 = 64, 512, 384
    k2x, k2w, k2b = jax.random.split(jax.random.PRNGKey(1), 3)
    x2 = jax.random.normal(k2x, (B2, Din2), dtype=jnp.float32)
    bnd2 = 1.0 / (Din2 ** 0.5)
    w2 = jax.random.uniform(k2w, (Dout2, Din2), jnp.float32, -bnd2, bnd2)
    b2 = jax.random.uniform(k2b, (Dout2,), jnp.float32, -bnd2, bnd2)
    g2 = jnp.ones((Dout2,), jnp.float32)
    be2 = jnp.zeros((Dout2,), jnp.float32)
    out4 = jax.block_until_ready(elasticnet_forward(x2, w2, b2, g2, be2))
    ref4 = reference_forward(x2, w2, b2, g2, be2)
    assert jnp.allclose(out4, ref4, atol=2e-3, rtol=2e-3), "multi-tile mismatch"

    print("KERNEL_OK")
</pallas_src>

<mosaic_0001>
module attributes {stable_mosaic.version = 11 : i64} {
  func.func @_elasticnet_kernel(%arg0: i32, %arg1: i32, %arg2: memref<8x128xf32, #tpu.memory_space<vmem>>, %arg3: memref<128x128xf32, #tpu.memory_space<vmem>>, %arg4: memref<3x128xf32, #tpu.memory_space<vmem>>, %arg5: memref<8x128xf32, #tpu.memory_space<vmem>>) attributes {dimension_semantics = [#tpu.dimension_semantics<parallel>, #tpu.dimension_semantics<arbitrary>], iteration_bounds = array<i64: 1, 1>, scalar_prefetch = 0 : i64, scratch_operands = 0 : i64, tpu.core_type = #tpu.core_type<tc>, window_params = [{pipeline_mode = #tpu.pipeline_mode<synchronous>, transform_indices = @transform_0, window_bounds = array<i64: 8, 128>}, {transform_indices = @transform_1, window_bounds = array<i64: 128, 128>}, {transform_indices = @transform_2, window_bounds = array<i64: 3, 128>}, {transform_indices = @transform_3, window_bounds = array<i64: 8, 128>}]} {
    %c0_i32 = arith.constant 0 : i32
    %0 = arith.cmpi eq, %arg1, %c0_i32 : i32
    %1 = arith.extui %0 : i1 to i32
    %c0_i32_0 = arith.constant 0 : i32
    %2 = arith.cmpi ne, %1, %c0_i32_0 : i32
    scf.if %2 {
      %cst_9 = arith.constant 0.000000e+00 : f32
      %15 = vector.broadcast %cst_9 : f32 to vector<8x128xf32>
      %c0_10 = arith.constant 0 : index
      %c0_11 = arith.constant 0 : index
      %16 = vector.load %arg5[%c0_10, %c0_11] : memref<8x128xf32, #tpu.memory_space<vmem>>, vector<8x128xf32>
      tpu.vector_store %arg5[%c0_10, %c0_11], %15 {strides = array<i32>} : memref<8x128xf32, #tpu.memory_space<vmem>>, vector<8x128xf32>,
    } else {
    }
    %c128_i32 = arith.constant 128 : i32
    %3 = arith.muli %arg1, %c128_i32 : i32
    %4 = tpu.assume_multiple %3, 128 : i32
    %c0 = arith.constant 0 : index
    %5 = arith.index_cast %4 : i32 to index
    %6 = vector.load %arg2[%c0, %5] : memref<8x128xf32, #tpu.memory_space<vmem>>, vector<8x128xf32>
    %c0_1 = arith.constant 0 : index
    %c0_2 = arith.constant 0 : index
    %7 = vector.load %arg5[%c0_1, %c0_2] : memref<8x128xf32, #tpu.memory_space<vmem>>, vector<8x128xf32>
    %c0_3 = arith.constant 0 : index
    %c0_4 = arith.constant 0 : index
    %8 = vector.load %arg3[%c0_3, %c0_4] : memref<128x128xf32, #tpu.memory_space<vmem>>, vector<128x128xf32>
    %cst = arith.constant dense<0.000000e+00> : vector<8x128xf32>
    %9 = tpu.matmul %6, %8, %cst {dimension_numbers = #tpu.dot_dimension_numbers<[1], [0], [0], [1], [0, 0, 1, 1], [], []>} : vector<8x128xf32>, vector<128x128xf32>, vector<8x128xf32> -> vector<8x128xf32>
    %10 = arith.addf %7, %9 : vector<8x128xf32>
    %c0_5 = arith.constant 0 : index
    %c0_6 = arith.constant 0 : index
    %11 = vector.load %arg5[%c0_5, %c0_6] : memref<8x128xf32, #tpu.memory_space<vmem>>, vector<8x128xf32>
    tpu.vector_store %arg5[%c0_5, %c0_6], %10 {strides = array<i32>} : memref<8x128xf32, #tpu.memory_space<vmem>>, vector<8x128xf32>,
    %c0_i32_7 = arith.constant 0 : i32
    %12 = arith.cmpi eq, %arg1, %c0_i32_7 : i32
    %13 = arith.extui %12 : i1 to i32
    %c0_i32_8 = arith.constant 0 : i32
    %14 = arith.cmpi ne, %13, %c0_i32_8 : i32
    scf.if %14 {
      %c0_9 = arith.constant 0 : index
      %c0_10 = arith.constant 0 : index
      %15 = vector.load %arg4[%c0_9, %c0_10] : memref<3x128xf32, #tpu.memory_space<vmem>>, vector<1x128xf32>
      %c1 = arith.constant 1 : index
      %c0_11 = arith.constant 0 : index
      %16 = vector.load %arg4[%c1, %c0_11] : memref<3x128xf32, #tpu.memory_space<vmem>>, vector<1x128xf32>
      %c2 = arith.constant 2 : index
      %c0_12 = arith.constant 0 : index
      %17 = vector.load %arg4[%c2, %c0_12] : memref<3x128xf32, #tpu.memory_space<vmem>>, vector<1x128xf32>
      %c0_13 = arith.constant 0 : index
      %c0_14 = arith.constant 0 : index
      %18 = vector.load %arg5[%c0_13, %c0_14] : memref<8x128xf32, #tpu.memory_space<vmem>>, vector<8x128xf32>
      %19 = vector.broadcast %15 : vector<1x128xf32> to vector<8x128xf32>
      %20 = arith.addf %18, %19 : vector<8x128xf32>
      %cst_15 = arith.constant dense<0.000000e+00> : vector<128xf32>
      %21 = vector.multi_reduction <add>, %20, %cst_15 [0] : vector<8x128xf32> to vector<128xf32>
      %22 = vector.shape_cast %21 : vector<128xf32> to vector<1x128xf32>
      %cst_16 = arith.constant 1.250000e-01 : f32
      %23 = vector.broadcast %cst_16 : f32 to vector<1x128xf32>
      %24 = arith.mulf %22, %23 : vector<1x128xf32>
      %25 = vector.broadcast %24 : vector<1x128xf32> to vector<8x128xf32>
      %26 = arith.subf %20, %25 : vector<8x128xf32>
      %27 = arith.mulf %26, %26 : vector<8x128xf32>
      %cst_17 = arith.constant dense<0.000000e+00> : vector<128xf32>
      %28 = vector.multi_reduction <add>, %27, %cst_17 [0] : vector<8x128xf32> to vector<128xf32>
      %29 = vector.shape_cast %28 : vector<128xf32> to vector<1x128xf32>
      %cst_18 = arith.constant 1.250000e-01 : f32
      %30 = vector.broadcast %cst_18 : f32 to vector<1x128xf32>
      %31 = arith.mulf %29, %30 : vector<1x128xf32>
      %cst_19 = arith.constant 9.99999974E-6 : f32
      %32 = vector.broadcast %cst_19 : f32 to vector<1x128xf32>
      %33 = arith.addf %31, %32 : vector<1x128xf32>
      %34 = math.rsqrt %33 : vector<1x128xf32>
      %35 = arith.mulf %16, %34 : vector<1x128xf32>
      %36 = vector.broadcast %35 : vector<1x128xf32> to vector<8x128xf32>
      %37 = arith.mulf %26, %36 : vector<8x128xf32>
      %38 = vector.broadcast %17 : vector<1x128xf32> to vector<8x128xf32>
      %39 = arith.addf %37, %38 : vector<8x128xf32>
      %c0_20 = arith.constant 0 : index
      %c0_21 = arith.constant 0 : index
      %40 = vector.load %arg5[%c0_20, %c0_21] : memref<8x128xf32, #tpu.memory_space<vmem>>, vector<8x128xf32>
      tpu.vector_store %arg5[%c0_20, %c0_21], %39 {strides = array<i32>} : memref<8x128xf32, #tpu.memory_space<vmem>>, vector<8x128xf32>,
    } else {
    }
    return
  }
  func.func @transform_0(%arg0: i32, %arg1: i32) -> (i32, i32) {
    %c0_i32 = arith.constant 0 : i32
    %c0_i32_0 = arith.constant 0 : i32
    %c0_i32_1 = arith.constant 0 : i32
    return %c0_i32, %c0_i32_0 : i32, i32
  }
  func.func @transform_1(%arg0: i32, %arg1: i32) -> (i32, i32) {
    %c0_i32 = arith.constant 0 : i32
    return %arg1, %arg0 : i32, i32
  }
  func.func @transform_2(%arg0: i32, %arg1: i32) -> (i32, i32) {
    %c0_i32 = arith.constant 0 : i32
    %c0_i32_0 = arith.constant 0 : i32
    return %c0_i32, %arg0 : i32, i32
  }
  func.func @transform_3(%arg0: i32, %arg1: i32) -> (i32, i32) {
    %c0_i32 = arith.constant 0 : i32
    %c0_i32_0 = arith.constant 0 : i32
    return %c0_i32, %arg0 : i32, i32
  }
}

</mosaic_0001>

<llo_original>
// kernel: _elasticnet_forward.1
$region0: #{_elasticnet_forward.1}
  #allocation0 [shape = 'u32[]', space=smem, size = 0x4, offset = 0x4, fixed_abs, tag = 'smem constant byte address 0x4 - core index']
  #allocation1 [shape = 'u32[144,128]{1,0:T(1,128)}', space=vmem, size = 0x12000, scoped, tag = 'internal scratch']
  %s0 = inlined_call_operand.vmem [shape: f32[8,128], index: 0, kind: input, shape index: {}]
  %s1 = inlined_call_operand.vmem [shape: f32[128,128], index: 1, kind: input, shape index: {}]
  %s2 = inlined_call_operand.vmem [shape: f32[3,128], index: 2, kind: input, shape index: {}]
  %s3 = inlined_call_operand.hbm [shape: f32[8,128], index: 3, kind: output, shape index: {}]
  %s4 = sld [smem:[#allocation0]]
  $region30: #{_elasticnet_forward.1} parent=0
    _
  %s6 = ssub.s32 1, %s4
  %s7 = scalar_select 0, %s6, %s4
  $region1: #{_elasticnet_forward.1} parent=0
    #allocation2 [shape = 'u8[4096]{0}', space=vmem, size = 0x1000, scoped, tag = 'output window, operand 0, single buffered']
    #allocation3 [shape = 's32[1]{0}', space=sflag, size = 0x4, scoped, tag = 'scoped memory for _elasticnet_forward.1']
    %8 = vsyncpa [#allocation3], 0
    // Predicated region
    $region2: #{_elasticnet_forward.1} parent=1 // pred_check
      _
    $region3: #{_elasticnet_forward.1} parent=1 // pred_check_branch
      %10 = sbr.rel (0) target = $region5
    $region4: #{_elasticnet_forward.1} parent=1 // pred_region
      _
    $region5: #{_elasticnet_forward.1} parent=1 // pred_fallthru
      _
    // Predicated region
    $region6: #{_elasticnet_forward.1} parent=1 // pred_check
      _
    $region7: #{_elasticnet_forward.1} parent=1 // pred_check_branch
      %12 = sbr.rel (0) target = $region9
    $region8: #{_elasticnet_forward.1} parent=1 // pred_region
      _
    $region9: #{_elasticnet_forward.1} parent=1 // pred_fallthru
      _
    // Predicated region
    $region10: #{_elasticnet_forward.1} parent=1 // pred_check
      _
    $region11: #{_elasticnet_forward.1} parent=1 // pred_check_branch
      %14 = sbr.rel (0) target = $region13
    $region12: #{_elasticnet_forward.1} parent=1 // pred_region
      _
    $region13: #{_elasticnet_forward.1} parent=1 // pred_fallthru
      _
    %p15 = scmp.eq.s32.totalorder 0, 0
    // Predicated region
    $region14: #{_elasticnet_forward.1} parent=1 // pred_check
      %p16 = pneg %p15
    $region15: #{_elasticnet_forward.1} parent=1 // pred_check_branch
      %18 = sbr.rel (%p16) target = $region17
    $region16: #{_elasticnet_forward.1} parent=1 // pred_region
      %19 = vst [vmem:[#allocation2] sm:$0xff] 0.0
    $region17: #{_elasticnet_forward.1} parent=1 // pred_fallthru
      _
    %s20 = smul.u32 0, 128
    %s21 = sshra.s32 %s20, 7
    %s22 = sand.u32 %s20, 127
    %s23 = scalar_lea.vmem %s0, %s21
    %v24 = vld [vmem:[%s23] sm:$0xff]
    %v25 = vld [vmem:[#allocation2] sm:$0xff]
    %v26 = vld [vmem:[%s1] sm:$0xff]
    %v27 = vld [vmem:[%s1 + $0x8] sm:$0xff]
    %v28 = vld [vmem:[%s1 + $0x10] sm:$0xff]
    %v29 = vld [vmem:[%s1 + $0x18] sm:$0xff]
    %v30 = vld [vmem:[%s1 + $0x20] sm:$0xff]
    %v31 = vld [vmem:[%s1 + $0x28] sm:$0xff]
    %v32 = vld [vmem:[%s1 + $0x30] sm:$0xff]
    %v33 = vld [vmem:[%s1 + $0x38] sm:$0xff]
    %v34 = vld [vmem:[%s1 + $0x40] sm:$0xff]
    %v35 = vld [vmem:[%s1 + $0x48] sm:$0xff]
    %v36 = vld [vmem:[%s1 + $0x50] sm:$0xff]
    %v37 = vld [vmem:[%s1 + $0x58] sm:$0xff]
    %v38 = vld [vmem:[%s1 + $0x60] sm:$0xff]
    %v39 = vld [vmem:[%s1 + $0x68] sm:$0xff]
    %v40 = vld [vmem:[%s1 + $0x70] sm:$0xff]
    %v41 = vld [vmem:[%s1 + $0x78] sm:$0xff]
    %42 = vmatprep.subr.mxu0 0.0
    %43 = vmatpush1.msra.mxu0 %v41
    %44 = vmatprep.subr.mxu0 0.0
    %45 = vmatpush1.msra.mxu0 %v40
    %46 = vmatprep.subr.mxu0 0.0
    %47 = vmatpush1.msra.mxu0 %v39
    %48 = vmatprep.subr.mxu0 0.0
    %49 = vmatpush1.msra.mxu0 %v38
    %50 = vmatprep.subr.mxu0 0.0
    %51 = vmatpush1.msra.mxu0 %v37
    %52 = vmatprep.subr.mxu0 0.0
    %53 = vmatpush1.msra.mxu0 %v36
    %54 = vmatprep.subr.mxu0 0.0
    %55 = vmatpush1.msra.mxu0 %v35
    %56 = vmatprep.subr.mxu0 0.0
    %57 = vmatpush1.msra.mxu0 %v34
    %58 = vmatprep.subr.mxu0 0.0
    %59 = vmatpush1.msra.mxu0 %v33
    %60 = vmatprep.subr.mxu0 0.0
    %61 = vmatpush1.msra.mxu0 %v32
    %62 = vmatprep.subr.mxu0 0.0
    %63 = vmatpush1.msra.mxu0 %v31
    %64 = vmatprep.subr.mxu0 0.0
    %65 = vmatpush1.msra.mxu0 %v30
    %66 = vmatprep.subr.mxu0 0.0
    %67 = vmatpush1.msra.mxu0 %v29
    %68 = vmatprep.subr.mxu0 0.0
    %69 = vmatpush1.msra.mxu0 %v28
    %70 = vmatprep.subr.mxu0 0.0
    %71 = vmatpush1.msra.mxu0 %v27
    %72 = vmatprep.subr.mxu0 0.0
    %73 = vmatpush1.msra.mxu0 %v26
    %74 = vmatprep.subr.mxu0 0.0
    %75 = vmatpush2.msra.mxu0 0.0
    %76 = vmatprep.subr.mxu0 0.0
    %77 = vmatpush2.msra.mxu0 0.0
    %78 = vmatprep.subr.mxu0 0.0
    %79 = vmatpush2.msra.mxu0 0.0
    %80 = vmatprep.subr.mxu0 0.0
    %81 = vmatpush2.msra.mxu0 0.0
    %82 = vmatprep.subr.mxu0 0.0
    %83 = vmatpush2.msra.mxu0 0.0
    %84 = vmatprep.subr.mxu0 0.0
    %85 = vmatpush2.msra.mxu0 0.0
    %86 = vmatprep.subr.mxu0 0.0
    %87 = vmatpush2.msra.mxu0 0.0
    %88 = vmatprep.subr.mxu0 0.0
    %89 = vmatpush2.msra.mxu0 0.0
    %90 = vmatprep.subr.mxu0 0.0
    %91 = vmatpush2.msra.mxu0 0.0
    %92 = vmatprep.subr.mxu0 0.0
    %93 = vmatpush2.msra.mxu0 0.0
    %94 = vmatprep.subr.mxu0 0.0
    %95 = vmatpush2.msra.mxu0 0.0
    %96 = vmatprep.subr.mxu0 0.0
    %97 = vmatpush2.msra.mxu0 0.0
    %98 = vmatprep.subr.mxu0 0.0
    %99 = vmatpush2.msra.mxu0 0.0
    %100 = vmatprep.subr.mxu0 0.0
    %101 = vmatpush2.msra.mxu0 0.0
    %102 = vmatprep.subr.mxu0 0.0
    %103 = vmatpush2.msra.mxu0 0.0
    %104 = vmatprep.subr.mxu0 0.0
    %105 = vmatpush2.msra.mxu0 0.0
    %106 = vmatprep.mubr.f32.mxu0 0.0
    %107 = vmatmul.mubr.f32.gmra.mxu0 %v24
    %v108 = vpop.f32.mrf.mxu0
    %v109 = vadd.f32 0.0, %v108
    %v110 = vpop.f32.mrf.mxu0
    %111 = vdwg.mxu0
    %v112 = vadd.f32 %v25, %v109
    %113 = vst [vmem:[#allocation2] sm:$0xff] %v112
    // Predicated region
    $region18: #{_elasticnet_forward.1} parent=1 // pred_check
      %p114 = pneg %p15
    $region19: #{_elasticnet_forward.1} parent=1 // pred_check_branch
      %116 = sbr.rel (%p114) target = $region21
    $region20: #{_elasticnet_forward.1} parent=1 // pred_region
      %v117 = vld [vmem:[%s2] sm:$0x1]
      %v118 = vld [vmem:[%s2 + $0x1] sm:$0x1]
      %v119 = vld [vmem:[%s2 + $0x2] sm:$0x1]
      %v120 = vld [vmem:[#allocation2] sm:$0xff]
      %v121 = vlaneseq
      %v122 = vshrl.u32 %v121, 7
      %v123 = vsub.s32 0, %v122
      %v124 = vrot.slane %v117, %v123
      %v125 = vadd.f32 %v120, %v124
      %v126 = vrot.slane %v125, 4
      %v127 = vadd.f32 %v125, %v126
      %v128 = vrot.slane %v127, 2
      %v129 = vadd.f32 %v127, %v128
      %v130 = vrot.slane %v129, 1
      %v131 = vadd.f32 %v129, %v130
      %v132 = vmul.f32 %v131, 0.125
      %v133 = vsub.f32 %v125, %v132
      %v134 = vmul.f32 %v133, %v133
      %v135 = vrot.slane %v134, 4
      %v136 = vadd.f32 %v134, %v135
      %v137 = vrot.slane %v136, 2
      %v138 = vadd.f32 %v136, %v137
      %v139 = vrot.slane %v138, 1
      %v140 = vadd.f32 %v138, %v139
      %v141 = vmul.f32 %v140, 0.125
      %v142 = vadd.f32 %v141, 1e-05
      %v143 = vrsqrt.pop %v142
      %v144 = vmul.f32 %v118, %v143
      %v145 = vlaneseq
      %v146 = vshrl.u32 %v145, 7
      %v147 = vsub.s32 0, %v146
      %v148 = vrot.slane %v144, %v147
      %v149 = vmul.f32 %v133, %v148
      %v150 = vlaneseq
      %v151 = vshrl.u32 %v150, 7
      %v152 = vsub.s32 0, %v151
      %v153 = vrot.slane %v119, %v152
      %v154 = vadd.f32 %v149, %v153
      %155 = vst [vmem:[#allocation2] sm:$0xff] %v154
    $region21: #{_elasticnet_forward.1} parent=1 // pred_fallthru
      _
    // Predicated region
    $region22: #{_elasticnet_forward.1} parent=1 // pred_check
      _
    $region23: #{_elasticnet_forward.1} parent=1 // pred_check_branch
      %157 = sbr.rel (0) target = $region25
    $region24: #{_elasticnet_forward.1} parent=1 // pred_region
      %s159 = ssub.s32 128, 128
      %160 = vsyncadd [#allocation3], %s159
      %s162 = sshll.u32 [#allocation2], 4
      %s163 = int_to_ptr.vmem [resolvable:$true] %s162
      %165 = dma.vmem_to_hbm [thread:$0]  %s163, 128, %s3, [#allocation3]
    $region25: #{_elasticnet_forward.1} parent=1 // pred_fallthru
      _
    // Predicated region
    $region26: #{_elasticnet_forward.1} parent=1 // pred_check
      _
    $region27: #{_elasticnet_forward.1} parent=1 // pred_check_branch
      %167 = sbr.rel (0) target = $region29
    $region28: #{_elasticnet_forward.1} parent=1 // pred_region
      %168 = dma.done [#allocation3], 128
    $region29: #{_elasticnet_forward.1} parent=1 // pred_fallthru
      _
    %169 = vsyncpa [#allocation3], 1

</llo_original>
